<compile_context>
chip_gen: v5e
topology: v5e:2x2
jax: 0.10.0
libtpu: 0.0.40
codegen_flags: <defaults>
</compile_context>

<pallas_src>
import functools

import numpy as np
import jax
import jax.numpy as jnp
from jax.experimental import pallas as pl
from jax.experimental.pallas import tpu as pltpu


_LANE = 128


def _round_up(x: int, m: int) -> int:
    return ((x + m - 1) // m) * m


def _sublane_quantum(*dtypes) -> int:
    """Sublane packing quantum for the narrowest-friendly block layout."""
    q = 8
    for dt in dtypes:
        isz = jnp.dtype(dt).itemsize
        if isz == 2:
            q = max(q, 16)
        elif isz == 1:
            q = max(q, 32)
    return q


def _pick_row_tile(n_rows: int, bytes_per_row: int, quantum: int,
                   max_step_bytes: int = 4 << 20) -> int:
    """Rows-of-128 processed per grid step.

    Honest budget: `bytes_per_row` already accounts for all three inputs in
    their native dtypes with no sublane padding (the (TR, 128) layout has
    none).  Double-buffered, a 4 MiB step stays well inside v5e's 16 MiB
    scoped-VMEM default while keeping blocks >= the ~512 KiB needed to sit on
    the HBM roofline.
    """
    if n_rows <= quantum:
        return n_rows                       # full dim -> always a legal block
    tr = max(quantum,
             (max_step_bytes // max(bytes_per_row, 1)) // quantum * quantum)
    # Keep >= 2 grid steps so "parallel" can shard across v7x's 2 TensorCores.
    half = _round_up(-(-n_rows // 2), quantum)
    tr = min(tr, half)
    return max(tr, quantum)


def _ada_charbonnier_kernel(pred_ref, imgt_ref, w_ref, out_ref, *,
                            eps, n_valid_rows, mask_rows):
    # pred_ref / imgt_ref : [B,  C,  TR, 128]  (native dtype, VMEM blocks)
    # w_ref               : [Wb, Cw, TR, 128]  Wb in {1,B}, Cw in {1,C}
    # out_ref             : [1, 1, 128]        lane-dense per-tile partial (f32)
    pred = pred_ref[...].astype(jnp.float32)
    imgt = imgt_ref[...].astype(jnp.float32)
    w = w_ref[...].astype(jnp.float32)

    diff = pred - imgt
    cb = jnp.sqrt(diff * diff + eps)                      # Charbonnier penalty

    if w.shape[1] == 1:
        # Channel-broadcast weight: regroup as w * sum_C(cb); saves (C-1)
        # multiplies per pixel and never materializes the broadcast.
        prod = w[:, 0, :, :] * jnp.sum(cb, axis=1)        # [max(B,Wb), TR, 128]
    else:
        prod = cb * w                                     # [B, C, TR, 128]

    if mask_rows:
        # Ragged tail: the last grid step reads rows past n_valid_rows
        # (undefined data).  jnp.where selects, so garbage (even NaN/Inf)
        # in masked-out positions never reaches the sum.
        tr = prod.shape[-2]
        row_ids = (pl.program_id(0) * tr
                   + jax.lax.broadcasted_iota(jnp.int32, (tr, _LANE), 0))
        prod = jnp.where(row_ids < n_valid_rows, prod, 0.0)

    red = jnp.sum(prod, axis=tuple(range(prod.ndim - 2)))  # [TR, 128] (VPU)
    out_ref[...] = jnp.sum(red, axis=0)[None, None, :]     # (1, 1, 128) store


@functools.partial(jax.jit, static_argnames=("eps",))
def ada_charbonnier_loss(imgt_pred, imgt, weight, eps=1e-6):
    imgt_pred = jnp.asarray(imgt_pred)
    imgt = jnp.asarray(imgt)
    weight = jnp.asarray(weight)

    assert imgt_pred.shape == imgt.shape and imgt_pred.ndim == 4, \
        "expected NCHW prediction / target"
    b, c, h, w_sp = imgt_pred.shape

    # Normalize weight to [Wb, Cw, H, W] with Wb in {1, B}, Cw in {1, C}.
    # Batch and channel broadcasts stay implicit (done on the VPU in-kernel);
    # only a (rare) spatial broadcast is materialized.
    if weight.ndim < 4:
        weight = weight.reshape((1,) * (4 - weight.ndim) + weight.shape)
    wb, cw = weight.shape[0], weight.shape[1]
    assert wb in (1, b), f"weight batch dim {wb} not broadcastable to B={b}"
    assert cw in (1, c), f"weight channel dim {cw} not broadcastable to C={c}"
    if weight.shape[2:] != (h, w_sp):
        weight = jnp.broadcast_to(weight, (wb, cw, h, w_sp))

    hw = h * w_sp
    hw_p = _round_up(hw, _LANE)
    pad = hw_p - hw
    n_rows = hw_p // _LANE

    pred_r = imgt_pred.reshape(b, c, hw)
    imgt_r = imgt.reshape(b, c, hw)
    w_r = weight.reshape(wb, cw, hw)
    if pad:
        # Fallback only when H*W % 128 != 0: pad < 128 lanes.  Pads are real
        # zeros and the weight pad is zero, so padded lanes contribute 0.
        pred_r = jnp.pad(pred_r, ((0, 0), (0, 0), (0, pad)))
        imgt_r = jnp.pad(imgt_r, ((0, 0), (0, 0), (0, pad)))
        w_r = jnp.pad(w_r, ((0, 0), (0, 0), (0, pad)))
    # Lane/sublane-dense layout: last two dims (rows, 128); reshape is
    # copy-free (contiguous trailing-dim split).
    pred_r = pred_r.reshape(b, c, n_rows, _LANE)
    imgt_r = imgt_r.reshape(b, c, n_rows, _LANE)
    w_r = w_r.reshape(wb, cw, n_rows, _LANE)

    quantum = _sublane_quantum(pred_r.dtype, imgt_r.dtype, w_r.dtype)
    bytes_per_row = _LANE * (
        b * c * (pred_r.dtype.itemsize + imgt_r.dtype.itemsize)
        + wb * cw * w_r.dtype.itemsize)
    tr = _pick_row_tile(n_rows, bytes_per_row, quantum)
    n_tiles = -(-n_rows // tr)
    mask_rows = (n_rows % tr) != 0          # static: full tiles skip the mask

    kernel = functools.partial(
        _ada_charbonnier_kernel, eps=float(eps),
        n_valid_rows=n_rows, mask_rows=mask_rows)

    partials = pl.pallas_call(
        kernel,
        out_shape=jax.ShapeDtypeStruct((n_tiles, 1, _LANE), jnp.float32),
        grid=(n_tiles,),
        in_specs=[
            pl.BlockSpec((b, c, tr, _LANE), lambda t: (0, 0, t, 0)),
            pl.BlockSpec((b, c, tr, _LANE), lambda t: (0, 0, t, 0)),
            pl.BlockSpec((wb, cw, tr, _LANE), lambda t: (0, 0, t, 0)),
        ],
        out_specs=pl.BlockSpec((1, 1, _LANE), lambda t: (t, 0, 0)),
        compiler_params=pltpu.CompilerParams(
            dimension_semantics=("parallel",),
            vmem_limit_bytes=32 << 20),
    )(pred_r, imgt_r, w_r)

    total = jnp.sum(partials)                       # tiny final reduce
    return total / jnp.float32(b * c * h * w_sp)    # mean over pred's shape


class AdaCharbonnierLoss:
    """Pallas-TPU port of modules/loss.py::AdaCharbonnierLoss."""

    def __init__(self, weight):
        # Stored for parity with the PyTorch module; the reference forward()
        # does NOT multiply by self.weight, so neither do we.
        self.weight = weight

    def __call__(self, imgt_pred, imgt, weight, **kwargs):
        return ada_charbonnier_loss(imgt_pred, imgt, weight)


# ---------------------------------------------------------------------------
if __name__ == "__main__":
    key = jax.random.PRNGKey(0)
    k1, k2, k3, k4, k5, k6, k7 = jax.random.split(key, 7)

    loss_fn = AdaCharbonnierLoss(weight=1.0)

    def ref_loss(p, g, w):
        p = np.asarray(p, np.float64)
        g = np.asarray(g, np.float64)
        w = np.asarray(w, np.float64)
        cb = np.sqrt((p - g) ** 2 + 1e-6)
        return float((cb * w).mean())

    # Case 1: channel-broadcast weight (Cw=1), single-tile path.
    B, C, H, W = 2, 3, 16, 16
    imgt = jax.random.normal(k1, (B, C, H, W), jnp.float32)
    pred = imgt + 0.1 * jax.random.normal(k2, (B, C, H, W), jnp.float32)
    w1 = jax.random.uniform(k3, (B, 1, H, W), jnp.float32)
    loss1 = jax.block_until_ready(loss_fn(pred, imgt, w1))
    np.testing.assert_allclose(float(loss1), ref_loss(pred, imgt, w1),
                               rtol=2e-5, atol=1e-6)

    # Case 2: full-channel weight (Cw=C).
    w2 = jax.random.uniform(k4, (B, C, H, W), jnp.float32)
    loss2 = jax.block_until_ready(loss_fn(pred, imgt, w2))
    np.testing.assert_allclose(float(loss2), ref_loss(pred, imgt, w2),
                               rtol=2e-5, atol=1e-6)

    # Case 3: multi-tile grid with a masked ragged last block (48*48 = 18
    # rows of 128 -> tile 16 rows, 2 grid steps, 2 valid rows in step 1).
    B3, C3, H3, W3 = 2, 3, 48, 48
    imgt3 = jax.random.normal(k5, (B3, C3, H3, W3), jnp.float32)
    pred3 = imgt3 + 0.1 * jax.random.normal(k6, (B3, C3, H3, W3), jnp.float32)
    w3 = jax.random.uniform(k7, (B3, 1, H3, W3), jnp.float32)
    loss3 = jax.block_until_ready(loss_fn(pred3, imgt3, w3))
    np.testing.assert_allclose(float(loss3), ref_loss(pred3, imgt3, w3),
                               rtol=2e-5, atol=1e-6)

    print("KERNEL_OK")
</pallas_src>

<mosaic_0001>
module attributes {stable_mosaic.version = 11 : i64} {
  func.func @_ada_charbonnier_kernel(%arg0: i32, %arg1: memref<2x3x2x128xf32, #tpu.memory_space<vmem>>, %arg2: memref<2x3x2x128xf32, #tpu.memory_space<vmem>>, %arg3: memref<2x1x2x128xf32, #tpu.memory_space<vmem>>, %arg4: memref<1x1x128xf32, #tpu.memory_space<vmem>>) attributes {dimension_semantics = [#tpu.dimension_semantics<parallel>], iteration_bounds = array<i64: 1>, scalar_prefetch = 0 : i64, scratch_operands = 0 : i64, tpu.core_type = #tpu.core_type<tc>, window_params = [{transform_indices = @transform_0, window_bounds = array<i64: 2, 3, 2, 128>}, {transform_indices = @transform_1, window_bounds = array<i64: 2, 3, 2, 128>}, {transform_indices = @transform_2, window_bounds = array<i64: 2, 1, 2, 128>}, {transform_indices = @transform_3, window_bounds = array<i64: 1, 1, 128>}]} {
    %c0 = arith.constant 0 : index
    %c0_0 = arith.constant 0 : index
    %c0_1 = arith.constant 0 : index
    %c0_2 = arith.constant 0 : index
    %0 = vector.load %arg1[%c0, %c0_0, %c0_1, %c0_2] : memref<2x3x2x128xf32, #tpu.memory_space<vmem>>, vector<2x3x2x128xf32>
    %c0_3 = arith.constant 0 : index
    %c0_4 = arith.constant 0 : index
    %c0_5 = arith.constant 0 : index
    %c0_6 = arith.constant 0 : index
    %1 = vector.load %arg2[%c0_3, %c0_4, %c0_5, %c0_6] : memref<2x3x2x128xf32, #tpu.memory_space<vmem>>, vector<2x3x2x128xf32>
    %c0_7 = arith.constant 0 : index
    %c0_8 = arith.constant 0 : index
    %c0_9 = arith.constant 0 : index
    %c0_10 = arith.constant 0 : index
    %2 = vector.load %arg3[%c0_7, %c0_8, %c0_9, %c0_10] : memref<2x1x2x128xf32, #tpu.memory_space<vmem>>, vector<2x1x2x128xf32>
    %3 = arith.subf %0, %1 : vector<2x3x2x128xf32>
    %4 = arith.mulf %3, %3 : vector<2x3x2x128xf32>
    %cst = arith.constant 9.99999997E-7 : f32
    %5 = vector.broadcast %cst : f32 to vector<2x3x2x128xf32>
    %6 = arith.addf %4, %5 : vector<2x3x2x128xf32>
    %7 = math.sqrt %6 : vector<2x3x2x128xf32>
    %8 = vector.shape_cast %2 : vector<2x1x2x128xf32> to vector<2x2x128xf32>
    %cst_11 = arith.constant dense<0.000000e+00> : vector<2x2x128xf32>
    %9 = vector.multi_reduction <add>, %7, %cst_11 [1] : vector<2x3x2x128xf32> to vector<2x2x128xf32>
    %10 = arith.mulf %8, %9 : vector<2x2x128xf32>
    %cst_12 = arith.constant dense<0.000000e+00> : vector<2x128xf32>
    %11 = vector.multi_reduction <add>, %10, %cst_12 [0] : vector<2x2x128xf32> to vector<2x128xf32>
    %cst_13 = arith.constant dense<0.000000e+00> : vector<128xf32>
    %12 = vector.multi_reduction <add>, %11, %cst_13 [0] : vector<2x128xf32> to vector<128xf32>
    %13 = vector.shape_cast %12 : vector<128xf32> to vector<1x1x128xf32>
    %c0_14 = arith.constant 0 : index
    %c0_15 = arith.constant 0 : index
    %c0_16 = arith.constant 0 : index
    %14 = vector.load %arg4[%c0_14, %c0_15, %c0_16] : memref<1x1x128xf32, #tpu.memory_space<vmem>>, vector<1x1x128xf32>
    tpu.vector_store %arg4[%c0_14, %c0_15, %c0_16], %13 {strides = array<i32>} : memref<1x1x128xf32, #tpu.memory_space<vmem>>, vector<1x1x128xf32>,
    return
  }
  func.func @transform_0(%arg0: i32) -> (i32, i32, i32, i32) {
    %c0_i32 = arith.constant 0 : i32
    %c0_i32_0 = arith.constant 0 : i32
    %c0_i32_1 = arith.constant 0 : i32
    %c0_i32_2 = arith.constant 0 : i32
    return %c0_i32, %c0_i32_0, %arg0, %c0_i32_1 : i32, i32, i32, i32
  }
  func.func @transform_1(%arg0: i32) -> (i32, i32, i32, i32) {
    %c0_i32 = arith.constant 0 : i32
    %c0_i32_0 = arith.constant 0 : i32
    %c0_i32_1 = arith.constant 0 : i32
    %c0_i32_2 = arith.constant 0 : i32
    return %c0_i32, %c0_i32_0, %arg0, %c0_i32_1 : i32, i32, i32, i32
  }
  func.func @transform_2(%arg0: i32) -> (i32, i32, i32, i32) {
    %c0_i32 = arith.constant 0 : i32
    %c0_i32_0 = arith.constant 0 : i32
    %c0_i32_1 = arith.constant 0 : i32
    %c0_i32_2 = arith.constant 0 : i32
    return %c0_i32, %c0_i32_0, %arg0, %c0_i32_1 : i32, i32, i32, i32
  }
  func.func @transform_3(%arg0: i32) -> (i32, i32, i32) {
    %c0_i32 = arith.constant 0 : i32
    %c0_i32_0 = arith.constant 0 : i32
    %c0_i32_1 = arith.constant 0 : i32
    return %arg0, %c0_i32, %c0_i32_0 : i32, i32, i32
  }
}

</mosaic_0001>

<llo_original>
// kernel: ada_charbonnier_loss.1
$region0: #{ada_charbonnier_loss.1}
  #allocation0 [shape = 'u32[]', space=smem, size = 0x4, offset = 0x4, fixed_abs, tag = 'smem constant byte address 0x4 - core index']
  #allocation1 [shape = 'u32[72,128]{1,0:T(1,128)}', space=vmem, size = 0x9000, scoped, tag = 'internal scratch']
  %s0 = inlined_call_operand.vmem [shape: f32[2,3,2,128], index: 0, kind: input, shape index: {}]
  %s1 = inlined_call_operand.vmem [shape: f32[2,3,2,128], index: 1, kind: input, shape index: {}]
  %s2 = inlined_call_operand.vmem [shape: f32[2,1,2,128], index: 2, kind: input, shape index: {}]
  %s3 = inlined_call_operand.vmem [shape: f32[1,1,128], index: 3, kind: output, shape index: {}]
  %s4 = sld [smem:[#allocation0]]
  $region22: #{ada_charbonnier_loss.1} parent=0
    _
  %s6 = ssub.s32 1, %s4
  %s7 = scalar_select 0, %s6, %s4
  // Predicated region
  $region2: #{ada_charbonnier_loss.1} parent=0 // pred_check
    _
  $region3: #{ada_charbonnier_loss.1} parent=0 // pred_check_branch
    %9 = sbr.rel (0) target = $region5
  $region4: #{ada_charbonnier_loss.1} parent=0 // pred_region
    _
  $region5: #{ada_charbonnier_loss.1} parent=0 // pred_fallthru
    _
  // Predicated region
  $region6: #{ada_charbonnier_loss.1} parent=0 // pred_check
    _
  $region7: #{ada_charbonnier_loss.1} parent=0 // pred_check_branch
    %11 = sbr.rel (0) target = $region9
  $region8: #{ada_charbonnier_loss.1} parent=0 // pred_region
    _
  $region9: #{ada_charbonnier_loss.1} parent=0 // pred_fallthru
    _
  // Predicated region
  $region10: #{ada_charbonnier_loss.1} parent=0 // pred_check
    _
  $region11: #{ada_charbonnier_loss.1} parent=0 // pred_check_branch
    %13 = sbr.rel (0) target = $region13
  $region12: #{ada_charbonnier_loss.1} parent=0 // pred_region
    _
  $region13: #{ada_charbonnier_loss.1} parent=0 // pred_fallthru
    _
  %v14 = vld [vmem:[%s0] sm:$0x3]
  %v15 = vld [vmem:[%s0 + $0x2] sm:$0x3]
  %v16 = vld [vmem:[%s0 + $0x4] sm:$0x3]
  %v17 = vld [vmem:[%s0 + $0x6] sm:$0x3]
  %v18 = vld [vmem:[%s0 + $0x8] sm:$0x3]
  %v19 = vld [vmem:[%s0 + $0xa] sm:$0x3]
  %v20 = vld [vmem:[%s1] sm:$0x3]
  %v21 = vld [vmem:[%s1 + $0x2] sm:$0x3]
  %v22 = vld [vmem:[%s1 + $0x4] sm:$0x3]
  %v23 = vld [vmem:[%s1 + $0x6] sm:$0x3]
  %v24 = vld [vmem:[%s1 + $0x8] sm:$0x3]
  %v25 = vld [vmem:[%s1 + $0xa] sm:$0x3]
  %v26 = vld [vmem:[%s2] sm:$0x3]
  %v27 = vld [vmem:[%s2 + $0x2] sm:$0x3]
  %v28 = vsub.f32 %v14, %v20
  %v29 = vsub.f32 %v15, %v21
  %v30 = vsub.f32 %v16, %v22
  %v31 = vsub.f32 %v17, %v23
  %v32 = vsub.f32 %v18, %v24
  %v33 = vsub.f32 %v19, %v25
  %v34 = vmul.f32 %v28, %v28
  %v35 = vmul.f32 %v29, %v29
  %v36 = vmul.f32 %v30, %v30
  %v37 = vmul.f32 %v31, %v31
  %v38 = vmul.f32 %v32, %v32
  %v39 = vmul.f32 %v33, %v33
  %v40 = vadd.f32 %v34, 1e-06
  %v41 = vadd.f32 %v35, 1e-06
  %v42 = vadd.f32 %v36, 1e-06
  %v43 = vadd.f32 %v37, 1e-06
  %v44 = vadd.f32 %v38, 1e-06
  %v45 = vadd.f32 %v39, 1e-06
  %v46 = vrsqrt.pop %v40
  %v47 = vmul.f32 %v46, %v40
  %v48 = vmul.f32 %v47, %v46
  %v49 = vmul.f32 0.5, %v48
  %v50 = vsub.f32 1.5, %v49
  %v51 = vmul.f32 %v46, %v50
  %v52 = vmul.f32 %v40, %v51
  %vm53 = vcmp.eq.f32.partialorder %v40, inf
  %v54 = vsel %vm53, %v40, %v52
  %vm55 = vcmp.eq.f32.partialorder %v40, 0.0
  %v56 = vand.u32 %v40, 2147483648
  %v57 = vsel %vm55, %v56, %v54
  %v58 = vrsqrt.pop %v41
  %v59 = vmul.f32 %v58, %v41
  %v60 = vmul.f32 %v59, %v58
  %v61 = vmul.f32 0.5, %v60
  %v62 = vsub.f32 1.5, %v61
  %v63 = vmul.f32 %v58, %v62
  %v64 = vmul.f32 %v41, %v63
  %vm65 = vcmp.eq.f32.partialorder %v41, inf
  %v66 = vsel %vm65, %v41, %v64
  %vm67 = vcmp.eq.f32.partialorder %v41, 0.0
  %v68 = vand.u32 %v41, 2147483648
  %v69 = vsel %vm67, %v68, %v66
  %v70 = vrsqrt.pop %v42
  %v71 = vmul.f32 %v70, %v42
  %v72 = vmul.f32 %v71, %v70
  %v73 = vmul.f32 0.5, %v72
  %v74 = vsub.f32 1.5, %v73
  %v75 = vmul.f32 %v70, %v74
  %v76 = vmul.f32 %v42, %v75
  %vm77 = vcmp.eq.f32.partialorder %v42, inf
  %v78 = vsel %vm77, %v42, %v76
  %vm79 = vcmp.eq.f32.partialorder %v42, 0.0
  %v80 = vand.u32 %v42, 2147483648
  %v81 = vsel %vm79, %v80, %v78
  %v82 = vrsqrt.pop %v43
  %v83 = vmul.f32 %v82, %v43
  %v84 = vmul.f32 %v83, %v82
  %v85 = vmul.f32 0.5, %v84
  %v86 = vsub.f32 1.5, %v85
  %v87 = vmul.f32 %v82, %v86
  %v88 = vmul.f32 %v43, %v87
  %vm89 = vcmp.eq.f32.partialorder %v43, inf
  %v90 = vsel %vm89, %v43, %v88
  %vm91 = vcmp.eq.f32.partialorder %v43, 0.0
  %v92 = vand.u32 %v43, 2147483648
  %v93 = vsel %vm91, %v92, %v90
  %v94 = vrsqrt.pop %v44
  %v95 = vmul.f32 %v94, %v44
  %v96 = vmul.f32 %v95, %v94
  %v97 = vmul.f32 0.5, %v96
  %v98 = vsub.f32 1.5, %v97
  %v99 = vmul.f32 %v94, %v98
  %v100 = vmul.f32 %v44, %v99
  %vm101 = vcmp.eq.f32.partialorder %v44, inf
  %v102 = vsel %vm101, %v44, %v100
  %vm103 = vcmp.eq.f32.partialorder %v44, 0.0
  %v104 = vand.u32 %v44, 2147483648
  %v105 = vsel %vm103, %v104, %v102
  %v106 = vrsqrt.pop %v45
  %v107 = vmul.f32 %v106, %v45
  %v108 = vmul.f32 %v107, %v106
  %v109 = vmul.f32 0.5, %v108
  %v110 = vsub.f32 1.5, %v109
  %v111 = vmul.f32 %v106, %v110
  %v112 = vmul.f32 %v45, %v111
  %vm113 = vcmp.eq.f32.partialorder %v45, inf
  %v114 = vsel %vm113, %v45, %v112
  %vm115 = vcmp.eq.f32.partialorder %v45, 0.0
  %v116 = vand.u32 %v45, 2147483648
  %v117 = vsel %vm115, %v116, %v114
  %vm118 = vcmask 1041408
  %v119 = vsel %vm118, %v57, 0.0
  %v120 = vsel %vm118, %v69, 0.0
  %v121 = vadd.f32 %v119, %v120
  %v122 = vsel %vm118, %v81, 0.0
  %v123 = vadd.f32 %v121, %v122
  %v124 = vsel %vm118, %v93, 0.0
  %v125 = vsel %vm118, %v105, 0.0
  %v126 = vadd.f32 %v124, %v125
  %v127 = vsel %vm118, %v117, 0.0
  %v128 = vadd.f32 %v126, %v127
  %v129 = vmul.f32 %v26, %v123
  %v130 = vmul.f32 %v27, %v128
  %v131 = vsel %vm118, %v129, 0.0
  %v132 = vsel %vm118, %v130, 0.0
  %v133 = vadd.f32 %v131, %v132
  %v134 = vsel %vm118, %v133, 0.0
  %v135 = vrot.slane %v134, 4
  %v136 = vadd.f32 %v134, %v135
  %v137 = vrot.slane %v136, 2
  %v138 = vadd.f32 %v136, %v137
  %v139 = vrot.slane %v138, 1
  %v140 = vadd.f32 %v138, %v139
  %141 = vst [vmem:[%s3] sm:$0x1] %v140
  // Predicated region
  $region14: #{ada_charbonnier_loss.1} parent=0 // pred_check
    _
  $region15: #{ada_charbonnier_loss.1} parent=0 // pred_check_branch
    %143 = sbr.rel (0) target = $region17
  $region16: #{ada_charbonnier_loss.1} parent=0 // pred_region
    _
  $region17: #{ada_charbonnier_loss.1} parent=0 // pred_fallthru
    _
  // Predicated region
  $region18: #{ada_charbonnier_loss.1} parent=0 // pred_check
    _
  $region19: #{ada_charbonnier_loss.1} parent=0 // pred_check_branch
    %145 = sbr.rel (0) target = $region21
  $region20: #{ada_charbonnier_loss.1} parent=0 // pred_region
    _
  $region21: #{ada_charbonnier_loss.1} parent=0 // pred_fallthru
    _

</llo_original>
